<compile_context>
chip_gen: v5e
topology: v5e:2x2
jax: 0.10.0
libtpu: 0.0.40
codegen_flags: <defaults>
</compile_context>

<pallas_src>
import numpy as np
import jax
import jax.numpy as jnp
from jax.experimental import pallas as pl
from jax.experimental.pallas import tpu as pltpu  # noqa: F401  (TPU backend)


# ------------------------------ fused kernel --------------------------------

def make_fused_kernel(n_grid, n_edge, n_ext, n_hidden):
    """Whole GatGegn forward as one kernel.  Ref order:
        x_grid(2N,Cin), mask(2N,2N), sel_o(B,2N), sel_d(B,2N),
        edge_x(B,De), external_x(B,Dx),
        (w, aux)*n_grid,                # GAT layers, aux = (5, Cout)
        (w, aux)*n_edge,                # Linear+BN+PReLU, aux = (2, Cout)
        (w, aux)*n_ext,
        w_o, w_d, w_e, w_x, aux,        # first head hidden layer (weight pre-split)
        (w, aux)*(n_hidden-1),
        w_out, b_out,
        out(B,1)
    """
    assert n_hidden >= 1

    def prelu(y, a):
        return jnp.where(y > 0.0, y, a * y)

    def kernel(*refs):
        it = iter(refs)
        xg = next(it)[...]          # (2N, Cin)  o/d streams stacked on rows
        mask = next(it)[...]        # (2N, 2N)   block-diagonal adjacency mask
        sel_o = next(it)[...]       # (B, 2N)    one-hot center-node selectors
        sel_d = next(it)[...]       # (B, 2N)
        e_act = next(it)[...]       # (B, De)
        x_act = next(it)[...]       # (B, Dx)

        def gat_layer(x, w, aux):
            att_src, att_dst = aux[0:1, :], aux[1:2, :]
            scale, shift, a = aux[2:3, :], aux[3:4, :], aux[4:5, :]
            h = jnp.dot(x, w, preferred_element_type=jnp.float32)      # (R, Cout)
            s = jnp.sum(h * att_src, axis=-1, keepdims=True)           # (R, 1) src scores (VPU)
            d = jnp.sum(h * att_dst, axis=-1, keepdims=True)           # (R, 1) dst scores (VPU)
            e = d + jnp.transpose(s)                                   # e[i,j] = d[i] + s[j]
            e = jnp.where(e > 0.0, e, 0.2 * e)                         # LeakyReLU(0.2)
            e = jnp.where(mask > 0.0, e, jnp.float32(-1e30))
            e = e - jnp.max(e, axis=-1, keepdims=True)                 # masked softmax
            p = jnp.exp(e)                                             # masked entries -> 0
            attn = p * pl.reciprocal(jnp.sum(p, axis=-1, keepdims=True), approx=True)
            y = jnp.dot(attn, h, preferred_element_type=jnp.float32)
            return prelu(y * scale + shift, a)                         # bias+BN folded

        def lin_layer(x, w, aux):                                      # BN scale folded into w
            y = jnp.dot(x, w, preferred_element_type=jnp.float32) + aux[0:1, :]
            return prelu(y, aux[1:2, :])

        g = xg
        for _ in range(n_grid):
            w = next(it)[...]; aux = next(it)[...]
            g = gat_layer(g, w, aux)
        o_out = jnp.dot(sel_o, g, preferred_element_type=jnp.float32)  # center node, o stream
        d_out = jnp.dot(sel_d, g, preferred_element_type=jnp.float32)  # center node, d stream

        for _ in range(n_edge):
            w = next(it)[...]; aux = next(it)[...]
            e_act = lin_layer(e_act, w, aux)
        for _ in range(n_ext):
            w = next(it)[...]; aux = next(it)[...]
            x_act = lin_layer(x_act, w, aux)

        # First head layer consumes cat([o, d, edge, external], -1); weight is
        # pre-split into four row-blocks so no lane-concatenation is needed.
        w_o = next(it)[...]; w_d = next(it)[...]
        w_e = next(it)[...]; w_x = next(it)[...]
        aux = next(it)[...]
        t = (jnp.dot(o_out, w_o, preferred_element_type=jnp.float32)
             + jnp.dot(d_out, w_d, preferred_element_type=jnp.float32)
             + jnp.dot(e_act, w_e, preferred_element_type=jnp.float32)
             + jnp.dot(x_act, w_x, preferred_element_type=jnp.float32)
             + aux[0:1, :])
        t = prelu(t, aux[1:2, :])
        for _ in range(n_hidden - 1):
            w = next(it)[...]; aux = next(it)[...]
            t = lin_layer(t, w, aux)

        w_out = next(it)[...]; b_out = next(it)[...]
        out_ref = next(it)
        out_ref[...] = jnp.dot(t, w_out, preferred_element_type=jnp.float32) + b_out

    return kernel


# ---------------------- deterministic parameter init ------------------------

def _init_linear(key, din, dout):
    kw, kb = jax.random.split(key)
    return {
        "w": jax.random.normal(kw, (din, dout), jnp.float32) / np.sqrt(din),
        "b": 0.1 * jax.random.normal(kb, (1, dout), jnp.float32),
    }


def _init_bn_prelu(key, d):
    kg, kb, km, kv = jax.random.split(key, 4)
    gamma = 1.0 + 0.1 * jax.random.normal(kg, (1, d), jnp.float32)
    beta = 0.1 * jax.random.normal(kb, (1, d), jnp.float32)
    mean = 0.1 * jax.random.normal(km, (1, d), jnp.float32)
    var = 1.0 + 0.5 * jax.random.uniform(kv, (1, d), jnp.float32)
    scale = gamma / jnp.sqrt(var + 1e-5)
    shift = beta - mean * scale
    return {"bn_scale": scale, "bn_shift": shift,
            "prelu_a": jnp.full((1, 1), 0.25, jnp.float32)}   # PReLU init = 0.25


def _init_gat(key, din, dout):
    kw, ks, kd, kb = jax.random.split(key, 4)
    return {
        "w": jax.random.normal(kw, (din, dout), jnp.float32) / np.sqrt(din),
        "att_src": jax.random.normal(ks, (dout, 1), jnp.float32) / np.sqrt(dout),
        "att_dst": jax.random.normal(kd, (dout, 1), jnp.float32) / np.sqrt(dout),
        "bias": 0.1 * jax.random.normal(kb, (1, dout), jnp.float32),
    }


def init_params(key, cfg):
    params = {"grid": [], "edge": [], "external": [], "total_hidden": []}
    gch = [cfg["grid_dim"]] + cfg["grid_layer_channels"]
    for i in range(len(gch) - 1):
        key, k1, k2 = jax.random.split(key, 3)
        layer = _init_gat(k1, gch[i], gch[i + 1])
        layer.update(_init_bn_prelu(k2, gch[i + 1]))
        params["grid"].append(layer)
    ech = [cfg["edge_dim"]] + cfg["edge_layer_channels"]
    for i in range(len(ech) - 1):
        key, k1, k2 = jax.random.split(key, 3)
        layer = _init_linear(k1, ech[i], ech[i + 1])
        layer.update(_init_bn_prelu(k2, ech[i + 1]))
        params["edge"].append(layer)
    xch = [cfg["external_dim"]] + cfg["external_layer_channels"]
    for i in range(len(xch) - 1):
        key, k1, k2 = jax.random.split(key, 3)
        layer = _init_linear(k1, xch[i], xch[i + 1])
        layer.update(_init_bn_prelu(k2, xch[i + 1]))
        params["external"].append(layer)
    total_in = (cfg["grid_layer_channels"][-1] * 2
                + cfg["edge_layer_channels"][-1]
                + cfg["external_layer_channels"][-1])
    och = [total_in] + cfg["out_layer_channels"]
    for i in range(len(och) - 2):
        key, k1, k2 = jax.random.split(key, 3)
        layer = _init_linear(k1, och[i], och[i + 1])
        layer.update(_init_bn_prelu(k2, och[i + 1]))
        params["total_hidden"].append(layer)
    key, k1 = jax.random.split(key)
    params["total_out"] = _init_linear(k1, och[-2], och[-1])
    return params


# ------------------------- host-side parameter packing ----------------------

def pack_params(params, cfg):
    """Fold BN (eval mode) / bias and pack each layer into (w, aux)."""
    packed = {"grid": [], "edge": [], "external": []}
    for layer in params["grid"]:
        scale, shift = layer["bn_scale"], layer["bn_shift"]
        aux = jnp.concatenate([
            jnp.transpose(layer["att_src"]),                   # (1, Cout)
            jnp.transpose(layer["att_dst"]),                   # (1, Cout)
            scale,                                             # BN scale
            layer["bias"] * scale + shift,                     # bias folded into BN shift
            jnp.broadcast_to(layer["prelu_a"], (1, scale.shape[1])),
        ], axis=0)                                             # (5, Cout)
        packed["grid"].append({"w": layer["w"], "aux": aux})

    def pack_lin(layer):
        scale, shift = layer["bn_scale"], layer["bn_shift"]
        w = layer["w"] * scale                                 # fold BN scale into W columns
        aux = jnp.concatenate([
            layer["b"] * scale + shift,                        # folded shift
            jnp.broadcast_to(layer["prelu_a"], (1, scale.shape[1])),
        ], axis=0)                                             # (2, Cout)
        return {"w": w, "aux": aux}

    packed["edge"] = [pack_lin(l) for l in params["edge"]]
    packed["external"] = [pack_lin(l) for l in params["external"]]

    hid = [pack_lin(l) for l in params["total_hidden"]]
    c_g = cfg["grid_layer_channels"][-1]
    c_e = cfg["edge_layer_channels"][-1]
    w0 = hid[0]["w"]                                           # (2*c_g + c_e + c_x, hidden)
    packed["hidden_first"] = {
        "w_o": w0[:c_g], "w_d": w0[c_g:2 * c_g],
        "w_e": w0[2 * c_g:2 * c_g + c_e], "w_x": w0[2 * c_g + c_e:],
        "aux": hid[0]["aux"],
    }
    packed["hidden_rest"] = hid[1:]
    packed["out_w"] = params["total_out"]["w"]
    packed["out_b"] = params["total_out"]["b"]
    return packed


# ------------------------------- forward pass --------------------------------

def build_dense_mask(edge_index, batch_size, grid_num):
    """edge_index permute/reshape + edge_index_addition -> dense (N, N) mask
    including GATConv's remove_self_loops/add_self_loops (mask[i,j]=1 iff j->i)."""
    num_nodes = batch_size * grid_num
    ei = jnp.transpose(edge_index, (1, 0, 2)).reshape(2, -1)          # (2, B*E)
    addition = jnp.repeat(jnp.arange(batch_size, dtype=ei.dtype),
                          (grid_num - 1) * 2)
    ei = ei + addition[None, :]
    src, dst = ei[0], ei[1]
    offdiag = (src != dst).astype(jnp.float32)                        # remove_self_loops
    mask = jnp.zeros((num_nodes, num_nodes), jnp.float32)
    mask = mask.at[dst, src].max(offdiag)
    diag = jnp.arange(num_nodes)
    mask = mask.at[diag, diag].set(1.0)                               # add_self_loops
    return mask


def build_forward(cfg):
    n_grid = len(cfg["grid_layer_channels"])
    n_edge = len(cfg["edge_layer_channels"])
    n_ext = len(cfg["external_layer_channels"])
    n_hidden = len(cfg["out_layer_channels"]) - 1
    grid_num = cfg["grid_num"]
    kernel = make_fused_kernel(n_grid, n_edge, n_ext, n_hidden)

    def forward(packed, o_grid_x, d_grid_x, edge_index, edge_x, external_x):
        batch = o_grid_x.shape[0]
        n = batch * grid_num
        o = o_grid_x.reshape(n, o_grid_x.shape[2])
        d = d_grid_x.reshape(n, d_grid_x.shape[2])
        xg = jnp.concatenate([o, d], axis=0)                           # (2N, Cin)

        mask_n = build_dense_mask(edge_index, batch, grid_num)         # (N, N)
        z = jnp.zeros_like(mask_n)
        mask2 = jnp.concatenate(                                       # block-diag (2N, 2N)
            [jnp.concatenate([mask_n, z], axis=1),
             jnp.concatenate([z, mask_n], axis=1)], axis=0)

        centers = jnp.arange(batch) * grid_num + grid_num // 2
        sel_o = jax.nn.one_hot(centers, 2 * n, dtype=jnp.float32)      # (B, 2N)
        sel_d = jax.nn.one_hot(centers + n, 2 * n, dtype=jnp.float32)  # (B, 2N)

        args = [xg, mask2, sel_o, sel_d, edge_x, external_x]
        for l in packed["grid"]:
            args += [l["w"], l["aux"]]
        for l in packed["edge"]:
            args += [l["w"], l["aux"]]
        for l in packed["external"]:
            args += [l["w"], l["aux"]]
        hf = packed["hidden_first"]
        args += [hf["w_o"], hf["w_d"], hf["w_e"], hf["w_x"], hf["aux"]]
        for l in packed["hidden_rest"]:
            args += [l["w"], l["aux"]]
        args += [packed["out_w"], packed["out_b"]]

        out = pl.pallas_call(
            kernel,
            out_shape=jax.ShapeDtypeStruct((batch, 1), jnp.float32),
        )(*args)
        return out[:, 0]                                               # squeeze(-1)

    return jax.jit(forward)


# ----------------------------------- main ------------------------------------

if __name__ == "__main__":
    cfg = {
        "train_batch_size": 2,
        "grid_num": 8,
        "grid_dim": 8,
        "edge_dim": 6,
        "external_dim": 5,
        "grid_layer_channels": [16, 32],
        "edge_layer_channels": [16],
        "external_layer_channels": [16],
        "out_layer_channels": [64, 1],
    }
    B, G = cfg["train_batch_size"], cfg["grid_num"]

    key = jax.random.PRNGKey(0)
    kp, ko, kd, ke, kx = jax.random.split(key, 5)
    params = init_params(kp, cfg)
    packed = pack_params(params, cfg)

    o_grid_x = jax.random.normal(ko, (B, G, cfg["grid_dim"]), jnp.float32)
    d_grid_x = jax.random.normal(kd, (B, G, cfg["grid_dim"]), jnp.float32)
    edge_x = jax.random.normal(ke, (B, cfg["edge_dim"]), jnp.float32)
    external_x = jax.random.normal(kx, (B, cfg["external_dim"]), jnp.float32)

    # Bidirectional path graph per sample, constructed so the module's
    # "+ batch index" edge_index_addition yields valid global ids b*grid_num + local.
    src_local = np.concatenate([np.arange(G - 1), np.arange(1, G)])
    dst_local = np.concatenate([np.arange(1, G), np.arange(G - 1)])
    base = np.stack([src_local, dst_local]).astype(np.int32)          # (2, 2*(G-1))
    edge_index = np.stack([base + b * (G - 1) for b in range(B)]).astype(np.int32)
    edge_index = jnp.asarray(edge_index)                              # (B, 2, 2*(G-1))

    fwd = build_forward(cfg)
    out = fwd(packed, o_grid_x, d_grid_x, edge_index, edge_x, external_x)
    jax.block_until_ready(out)
    assert out.shape == (B,), out.shape
    print("KERNEL_OK")
</pallas_src>

<mosaic_0001>
module attributes {stable_mosaic.version = 11 : i64} {
  func.func @kernel(%arg0: memref<32x8xf32, #tpu.memory_space<vmem>>, %arg1: memref<32x32xf32, #tpu.memory_space<vmem>>, %arg2: memref<2x32xf32, #tpu.memory_space<vmem>>, %arg3: memref<2x32xf32, #tpu.memory_space<vmem>>, %arg4: memref<2x6xf32, #tpu.memory_space<vmem>>, %arg5: memref<2x5xf32, #tpu.memory_space<vmem>>, %arg6: memref<8x16xf32, #tpu.memory_space<vmem>>, %arg7: memref<5x16xf32, #tpu.memory_space<vmem>>, %arg8: memref<16x32xf32, #tpu.memory_space<vmem>>, %arg9: memref<5x32xf32, #tpu.memory_space<vmem>>, %arg10: memref<6x16xf32, #tpu.memory_space<vmem>>, %arg11: memref<2x16xf32, #tpu.memory_space<vmem>>, %arg12: memref<5x16xf32, #tpu.memory_space<vmem>>, %arg13: memref<2x16xf32, #tpu.memory_space<vmem>>, %arg14: memref<32x64xf32, #tpu.memory_space<vmem>>, %arg15: memref<32x64xf32, #tpu.memory_space<vmem>>, %arg16: memref<16x64xf32, #tpu.memory_space<vmem>>, %arg17: memref<16x64xf32, #tpu.memory_space<vmem>>, %arg18: memref<2x64xf32, #tpu.memory_space<vmem>>, %arg19: memref<64x1xf32, #tpu.memory_space<vmem>>, %arg20: memref<1x1xf32, #tpu.memory_space<vmem>>, %arg21: memref<2x1xf32, #tpu.memory_space<vmem>>) attributes {dimension_semantics = [], scalar_prefetch = 0 : i64, scratch_operands = 0 : i64, tpu.core_type = #tpu.core_type<tc>} {
    %c0 = arith.constant 0 : index
    %c0_0 = arith.constant 0 : index
    %0 = vector.load %arg0[%c0, %c0_0] : memref<32x8xf32, #tpu.memory_space<vmem>>, vector<32x8xf32>
    %c0_1 = arith.constant 0 : index
    %c0_2 = arith.constant 0 : index
    %1 = vector.load %arg1[%c0_1, %c0_2] : memref<32x32xf32, #tpu.memory_space<vmem>>, vector<32x32xf32>
    %c0_3 = arith.constant 0 : index
    %c0_4 = arith.constant 0 : index
    %2 = vector.load %arg2[%c0_3, %c0_4] : memref<2x32xf32, #tpu.memory_space<vmem>>, vector<2x32xf32>
    %c0_5 = arith.constant 0 : index
    %c0_6 = arith.constant 0 : index
    %3 = vector.load %arg3[%c0_5, %c0_6] : memref<2x32xf32, #tpu.memory_space<vmem>>, vector<2x32xf32>
    %c0_7 = arith.constant 0 : index
    %c0_8 = arith.constant 0 : index
    %4 = vector.load %arg4[%c0_7, %c0_8] : memref<2x6xf32, #tpu.memory_space<vmem>>, vector<2x6xf32>
    %c0_9 = arith.constant 0 : index
    %c0_10 = arith.constant 0 : index
    %5 = vector.load %arg5[%c0_9, %c0_10] : memref<2x5xf32, #tpu.memory_space<vmem>>, vector<2x5xf32>
    %c0_11 = arith.constant 0 : index
    %c0_12 = arith.constant 0 : index
    %6 = vector.load %arg6[%c0_11, %c0_12] : memref<8x16xf32, #tpu.memory_space<vmem>>, vector<8x16xf32>
    %c0_13 = arith.constant 0 : index
    %c0_14 = arith.constant 0 : index
    %7 = vector.load %arg7[%c0_13, %c0_14] : memref<5x16xf32, #tpu.memory_space<vmem>>, vector<5x16xf32>
    %8 = vector.extract_strided_slice %7 {offsets = [0, 0], sizes = [1, 16], strides = [1, 1]} : vector<5x16xf32> to vector<1x16xf32>
    %9 = vector.extract_strided_slice %7 {offsets = [1, 0], sizes = [1, 16], strides = [1, 1]} : vector<5x16xf32> to vector<1x16xf32>
    %10 = vector.extract_strided_slice %7 {offsets = [2, 0], sizes = [1, 16], strides = [1, 1]} : vector<5x16xf32> to vector<1x16xf32>
    %11 = vector.extract_strided_slice %7 {offsets = [3, 0], sizes = [1, 16], strides = [1, 1]} : vector<5x16xf32> to vector<1x16xf32>
    %12 = vector.extract_strided_slice %7 {offsets = [4, 0], sizes = [1, 16], strides = [1, 1]} : vector<5x16xf32> to vector<1x16xf32>
    %cst = arith.constant dense<0.000000e+00> : vector<32x16xf32>
    %13 = tpu.matmul %0, %6, %cst {dimension_numbers = #tpu.dot_dimension_numbers<[1], [0], [0], [1], [0, 0, 1, 1], [], []>} : vector<32x8xf32>, vector<8x16xf32>, vector<32x16xf32> -> vector<32x16xf32>
    %14 = vector.broadcast %8 : vector<1x16xf32> to vector<32x16xf32>
    %15 = arith.mulf %13, %14 : vector<32x16xf32>
    %cst_15 = arith.constant dense<0.000000e+00> : vector<32xf32>
    %16 = vector.multi_reduction <add>, %15, %cst_15 [1] : vector<32x16xf32> to vector<32xf32>
    %17 = vector.shape_cast %16 : vector<32xf32> to vector<32x1xf32>
    %18 = vector.broadcast %9 : vector<1x16xf32> to vector<32x16xf32>
    %19 = arith.mulf %13, %18 : vector<32x16xf32>
    %cst_16 = arith.constant dense<0.000000e+00> : vector<32xf32>
    %20 = vector.multi_reduction <add>, %19, %cst_16 [1] : vector<32x16xf32> to vector<32xf32>
    %21 = vector.shape_cast %20 : vector<32xf32> to vector<32x1xf32>
    %22 = tpu.transpose %17, [1, 0] : vector<32x1xf32> -> vector<1x32xf32>
    %23 = vector.broadcast %21 : vector<32x1xf32> to vector<32x32xf32>
    %24 = vector.broadcast %22 : vector<1x32xf32> to vector<32x32xf32>
    %25 = arith.addf %23, %24 : vector<32x32xf32>
    %cst_17 = arith.constant 0.000000e+00 : f32
    %26 = vector.broadcast %cst_17 : f32 to vector<32x32xf32>
    %27 = arith.cmpf ogt, %25, %26 : vector<32x32xf32>
    %cst_18 = arith.constant 2.000000e-01 : f32
    %28 = vector.broadcast %cst_18 : f32 to vector<32x32xf32>
    %29 = arith.mulf %28, %25 : vector<32x32xf32>
    %30 = arith.select %27, %25, %29 : vector<32x32xi1>, vector<32x32xf32>
    %cst_19 = arith.constant 0.000000e+00 : f32
    %31 = vector.broadcast %cst_19 : f32 to vector<32x32xf32>
    %32 = arith.cmpf ogt, %1, %31 : vector<32x32xf32>
    %cst_20 = arith.constant -1.000000e+30 : f32
    %33 = vector.broadcast %cst_20 : f32 to vector<32x32xf32>
    %34 = arith.select %32, %30, %33 : vector<32x32xi1>, vector<32x32xf32>
    %cst_21 = arith.constant dense<0xFF800000> : vector<32xf32>
    %35 = vector.multi_reduction <maximumf>, %34, %cst_21 [1] : vector<32x32xf32> to vector<32xf32>
    %36 = vector.shape_cast %35 : vector<32xf32> to vector<32x1xf32>
    %37 = vector.broadcast %36 : vector<32x1xf32> to vector<32x32xf32>
    %38 = arith.subf %34, %37 : vector<32x32xf32>
    %39 = math.exp %38 : vector<32x32xf32>
    %cst_22 = arith.constant dense<0.000000e+00> : vector<32xf32>
    %40 = vector.multi_reduction <add>, %39, %cst_22 [1] : vector<32x32xf32> to vector<32xf32>
    %41 = vector.shape_cast %40 : vector<32xf32> to vector<32x1xf32>
    %42 = tpu.reciprocal %41 {approx = true} : vector<32x1xf32> -> vector<32x1xf32>
    %43 = vector.broadcast %42 : vector<32x1xf32> to vector<32x32xf32>
    %44 = arith.mulf %39, %43 : vector<32x32xf32>
    %cst_23 = arith.constant dense<0.000000e+00> : vector<32x16xf32>
    %45 = tpu.matmul %44, %13, %cst_23 {dimension_numbers = #tpu.dot_dimension_numbers<[1], [0], [0], [1], [0, 0, 1, 1], [], []>} : vector<32x32xf32>, vector<32x16xf32>, vector<32x16xf32> -> vector<32x16xf32>
    %46 = vector.broadcast %10 : vector<1x16xf32> to vector<32x16xf32>
    %47 = arith.mulf %45, %46 : vector<32x16xf32>
    %48 = vector.broadcast %11 : vector<1x16xf32> to vector<32x16xf32>
    %49 = arith.addf %47, %48 : vector<32x16xf32>
    %cst_24 = arith.constant 0.000000e+00 : f32
    %50 = vector.broadcast %cst_24 : f32 to vector<32x16xf32>
    %51 = arith.cmpf ogt, %49, %50 : vector<32x16xf32>
    %52 = vector.broadcast %12 : vector<1x16xf32> to vector<32x16xf32>
    %53 = arith.mulf %52, %49 : vector<32x16xf32>
    %54 = arith.select %51, %49, %53 : vector<32x16xi1>, vector<32x16xf32>
    %c0_25 = arith.constant 0 : index
    %c0_26 = arith.constant 0 : index
    %55 = vector.load %arg8[%c0_25, %c0_26] : memref<16x32xf32, #tpu.memory_space<vmem>>, vector<16x32xf32>
    %c0_27 = arith.constant 0 : index
    %c0_28 = arith.constant 0 : index
    %56 = vector.load %arg9[%c0_27, %c0_28] : memref<5x32xf32, #tpu.memory_space<vmem>>, vector<5x32xf32>
    %57 = vector.extract_strided_slice %56 {offsets = [0, 0], sizes = [1, 32], strides = [1, 1]} : vector<5x32xf32> to vector<1x32xf32>
    %58 = vector.extract_strided_slice %56 {offsets = [1, 0], sizes = [1, 32], strides = [1, 1]} : vector<5x32xf32> to vector<1x32xf32>
    %59 = vector.extract_strided_slice %56 {offsets = [2, 0], sizes = [1, 32], strides = [1, 1]} : vector<5x32xf32> to vector<1x32xf32>
    %60 = vector.extract_strided_slice %56 {offsets = [3, 0], sizes = [1, 32], strides = [1, 1]} : vector<5x32xf32> to vector<1x32xf32>
    %61 = vector.extract_strided_slice %56 {offsets = [4, 0], sizes = [1, 32], strides = [1, 1]} : vector<5x32xf32> to vector<1x32xf32>
    %cst_29 = arith.constant dense<0.000000e+00> : vector<32x32xf32>
    %62 = tpu.matmul %54, %55, %cst_29 {dimension_numbers = #tpu.dot_dimension_numbers<[1], [0], [0], [1], [0, 0, 1, 1], [], []>} : vector<32x16xf32>, vector<16x32xf32>, vector<32x32xf32> -> vector<32x32xf32>
    %63 = vector.broadcast %57 : vector<1x32xf32> to vector<32x32xf32>
    %64 = arith.mulf %62, %63 : vector<32x32xf32>
    %cst_30 = arith.constant dense<0.000000e+00> : vector<32xf32>
    %65 = vector.multi_reduction <add>, %64, %cst_30 [1] : vector<32x32xf32> to vector<32xf32>
    %66 = vector.shape_cast %65 : vector<32xf32> to vector<32x1xf32>
    %67 = vector.broadcast %58 : vector<1x32xf32> to vector<32x32xf32>
    %68 = arith.mulf %62, %67 : vector<32x32xf32>
    %cst_31 = arith.constant dense<0.000000e+00> : vector<32xf32>
    %69 = vector.multi_reduction <add>, %68, %cst_31 [1] : vector<32x32xf32> to vector<32xf32>
    %70 = vector.shape_cast %69 : vector<32xf32> to vector<32x1xf32>
    %71 = tpu.transpose %66, [1, 0] : vector<32x1xf32> -> vector<1x32xf32>
    %72 = vector.broadcast %70 : vector<32x1xf32> to vector<32x32xf32>
    %73 = vector.broadcast %71 : vector<1x32xf32> to vector<32x32xf32>
    %74 = arith.addf %72, %73 : vector<32x32xf32>
    %cst_32 = arith.constant 0.000000e+00 : f32
    %75 = vector.broadcast %cst_32 : f32 to vector<32x32xf32>
    %76 = arith.cmpf ogt, %74, %75 : vector<32x32xf32>
    %cst_33 = arith.constant 2.000000e-01 : f32
    %77 = vector.broadcast %cst_33 : f32 to vector<32x32xf32>
    %78 = arith.mulf %77, %74 : vector<32x32xf32>
    %79 = arith.select %76, %74, %78 : vector<32x32xi1>, vector<32x32xf32>
    %cst_34 = arith.constant 0.000000e+00 : f32
    %80 = vector.broadcast %cst_34 : f32 to vector<32x32xf32>
    %81 = arith.cmpf ogt, %1, %80 : vector<32x32xf32>
    %cst_35 = arith.constant -1.000000e+30 : f32
    %82 = vector.broadcast %cst_35 : f32 to vector<32x32xf32>
    %83 = arith.select %81, %79, %82 : vector<32x32xi1>, vector<32x32xf32>
    %cst_36 = arith.constant dense<0xFF800000> : vector<32xf32>
    %84 = vector.multi_reduction <maximumf>, %83, %cst_36 [1] : vector<32x32xf32> to vector<32xf32>
    %85 = vector.shape_cast %84 : vector<32xf32> to vector<32x1xf32>
    %86 = vector.broadcast %85 : vector<32x1xf32> to vector<32x32xf32>
    %87 = arith.subf %83, %86 : vector<32x32xf32>
    %88 = math.exp %87 : vector<32x32xf32>
    %cst_37 = arith.constant dense<0.000000e+00> : vector<32xf32>
    %89 = vector.multi_reduction <add>, %88, %cst_37 [1] : vector<32x32xf32> to vector<32xf32>
    %90 = vector.shape_cast %89 : vector<32xf32> to vector<32x1xf32>
    %91 = tpu.reciprocal %90 {approx = true} : vector<32x1xf32> -> vector<32x1xf32>
    %92 = vector.broadcast %91 : vector<32x1xf32> to vector<32x32xf32>
    %93 = arith.mulf %88, %92 : vector<32x32xf32>
    %cst_38 = arith.constant dense<0.000000e+00> : vector<32x32xf32>
    %94 = tpu.matmul %93, %62, %cst_38 {dimension_numbers = #tpu.dot_dimension_numbers<[1], [0], [0], [1], [0, 0, 1, 1], [], []>} : vector<32x32xf32>, vector<32x32xf32>, vector<32x32xf32> -> vector<32x32xf32>
    %95 = vector.broadcast %59 : vector<1x32xf32> to vector<32x32xf32>
    %96 = arith.mulf %94, %95 : vector<32x32xf32>
    %97 = vector.broadcast %60 : vector<1x32xf32> to vector<32x32xf32>
    %98 = arith.addf %96, %97 : vector<32x32xf32>
    %cst_39 = arith.constant 0.000000e+00 : f32
    %99 = vector.broadcast %cst_39 : f32 to vector<32x32xf32>
    %100 = arith.cmpf ogt, %98, %99 : vector<32x32xf32>
    %101 = vector.broadcast %61 : vector<1x32xf32> to vector<32x32xf32>
    %102 = arith.mulf %101, %98 : vector<32x32xf32>
    %103 = arith.select %100, %98, %102 : vector<32x32xi1>, vector<32x32xf32>
    %cst_40 = arith.constant dense<0.000000e+00> : vector<2x32xf32>
    %104 = tpu.matmul %2, %103, %cst_40 {dimension_numbers = #tpu.dot_dimension_numbers<[1], [0], [0], [1], [0, 0, 1, 1], [], []>} : vector<2x32xf32>, vector<32x32xf32>, vector<2x32xf32> -> vector<2x32xf32>
    %cst_41 = arith.constant dense<0.000000e+00> : vector<2x32xf32>
    %105 = tpu.matmul %3, %103, %cst_41 {dimension_numbers = #tpu.dot_dimension_numbers<[1], [0], [0], [1], [0, 0, 1, 1], [], []>} : vector<2x32xf32>, vector<32x32xf32>, vector<2x32xf32> -> vector<2x32xf32>
    %c0_42 = arith.constant 0 : index
    %c0_43 = arith.constant 0 : index
    %106 = vector.load %arg10[%c0_42, %c0_43] : memref<6x16xf32, #tpu.memory_space<vmem>>, vector<6x16xf32>
    %c0_44 = arith.constant 0 : index
    %c0_45 = arith.constant 0 : index
    %107 = vector.load %arg11[%c0_44, %c0_45] : memref<2x16xf32, #tpu.memory_space<vmem>>, vector<2x16xf32>
    %cst_46 = arith.constant dense<0.000000e+00> : vector<2x16xf32>
    %108 = tpu.matmul %4, %106, %cst_46 {dimension_numbers = #tpu.dot_dimension_numbers<[1], [0], [0], [1], [0, 0, 1, 1], [], []>} : vector<2x6xf32>, vector<6x16xf32>, vector<2x16xf32> -> vector<2x16xf32>
    %109 = vector.extract_strided_slice %107 {offsets = [0, 0], sizes = [1, 16], strides = [1, 1]} : vector<2x16xf32> to vector<1x16xf32>
    %110 = vector.broadcast %109 : vector<1x16xf32> to vector<2x16xf32>
    %111 = arith.addf %108, %110 : vector<2x16xf32>
    %112 = vector.extract_strided_slice %107 {offsets = [1, 0], sizes = [1, 16], strides = [1, 1]} : vector<2x16xf32> to vector<1x16xf32>
    %cst_47 = arith.constant 0.000000e+00 : f32
    %113 = vector.broadcast %cst_47 : f32 to vector<2x16xf32>
    %114 = arith.cmpf ogt, %111, %113 : vector<2x16xf32>
    %115 = vector.broadcast %112 : vector<1x16xf32> to vector<2x16xf32>
    %116 = arith.mulf %115, %111 : vector<2x16xf32>
    %117 = arith.select %114, %111, %116 : vector<2x16xi1>, vector<2x16xf32>
    %c0_48 = arith.constant 0 : index
    %c0_49 = arith.constant 0 : index
    %118 = vector.load %arg12[%c0_48, %c0_49] : memref<5x16xf32, #tpu.memory_space<vmem>>, vector<5x16xf32>
    %c0_50 = arith.constant 0 : index
    %c0_51 = arith.constant 0 : index
    %119 = vector.load %arg13[%c0_50, %c0_51] : memref<2x16xf32, #tpu.memory_space<vmem>>, vector<2x16xf32>
    %cst_52 = arith.constant dense<0.000000e+00> : vector<2x16xf32>
    %120 = tpu.matmul %5, %118, %cst_52 {dimension_numbers = #tpu.dot_dimension_numbers<[1], [0], [0], [1], [0, 0, 1, 1], [], []>} : vector<2x5xf32>, vector<5x16xf32>, vector<2x16xf32> -> vector<2x16xf32>
    %121 = vector.extract_strided_slice %119 {offsets = [0, 0], sizes = [1, 16], strides = [1, 1]} : vector<2x16xf32> to vector<1x16xf32>
    %122 = vector.broadcast %121 : vector<1x16xf32> to vector<2x16xf32>
    %123 = arith.addf %120, %122 : vector<2x16xf32>
    %124 = vector.extract_strided_slice %119 {offsets = [1, 0], sizes = [1, 16], strides = [1, 1]} : vector<2x16xf32> to vector<1x16xf32>
    %cst_53 = arith.constant 0.000000e+00 : f32
    %125 = vector.broadcast %cst_53 : f32 to vector<2x16xf32>
    %126 = arith.cmpf ogt, %123, %125 : vector<2x16xf32>
    %127 = vector.broadcast %124 : vector<1x16xf32> to vector<2x16xf32>
    %128 = arith.mulf %127, %123 : vector<2x16xf32>
    %129 = arith.select %126, %123, %128 : vector<2x16xi1>, vector<2x16xf32>
    %c0_54 = arith.constant 0 : index
    %c0_55 = arith.constant 0 : index
    %130 = vector.load %arg14[%c0_54, %c0_55] : memref<32x64xf32, #tpu.memory_space<vmem>>, vector<32x64xf32>
    %c0_56 = arith.constant 0 : index
    %c0_57 = arith.constant 0 : index
    %131 = vector.load %arg15[%c0_56, %c0_57] : memref<32x64xf32, #tpu.memory_space<vmem>>, vector<32x64xf32>
    %c0_58 = arith.constant 0 : index
    %c0_59 = arith.constant 0 : index
    %132 = vector.load %arg16[%c0_58, %c0_59] : memref<16x64xf32, #tpu.memory_space<vmem>>, vector<16x64xf32>
    %c0_60 = arith.constant 0 : index
    %c0_61 = arith.constant 0 : index
    %133 = vector.load %arg17[%c0_60, %c0_61] : memref<16x64xf32, #tpu.memory_space<vmem>>, vector<16x64xf32>
    %c0_62 = arith.constant 0 : index
    %c0_63 = arith.constant 0 : index
    %134 = vector.load %arg18[%c0_62, %c0_63] : memref<2x64xf32, #tpu.memory_space<vmem>>, vector<2x64xf32>
    %cst_64 = arith.constant dense<0.000000e+00> : vector<2x64xf32>
    %135 = tpu.matmul %104, %130, %cst_64 {dimension_numbers = #tpu.dot_dimension_numbers<[1], [0], [0], [1], [0, 0, 1, 1], [], []>} : vector<2x32xf32>, vector<32x64xf32>, vector<2x64xf32> -> vector<2x64xf32>
    %cst_65 = arith.constant dense<0.000000e+00> : vector<2x64xf32>
    %136 = tpu.matmul %105, %131, %cst_65 {dimension_numbers = #tpu.dot_dimension_numbers<[1], [0], [0], [1], [0, 0, 1, 1], [], []>} : vector<2x32xf32>, vector<32x64xf32>, vector<2x64xf32> -> vector<2x64xf32>
    %137 = arith.addf %135, %136 : vector<2x64xf32>
    %cst_66 = arith.constant dense<0.000000e+00> : vector<2x64xf32>
    %138 = tpu.matmul %117, %132, %cst_66 {dimension_numbers = #tpu.dot_dimension_numbers<[1], [0], [0], [1], [0, 0, 1, 1], [], []>} : vector<2x16xf32>, vector<16x64xf32>, vector<2x64xf32> -> vector<2x64xf32>
    %139 = arith.addf %137, %138 : vector<2x64xf32>
    %cst_67 = arith.constant dense<0.000000e+00> : vector<2x64xf32>
    %140 = tpu.matmul %129, %133, %cst_67 {dimension_numbers = #tpu.dot_dimension_numbers<[1], [0], [0], [1], [0, 0, 1, 1], [], []>} : vector<2x16xf32>, vector<16x64xf32>, vector<2x64xf32> -> vector<2x64xf32>
    %141 = arith.addf %139, %140 : vector<2x64xf32>
    %142 = vector.extract_strided_slice %134 {offsets = [0, 0], sizes = [1, 64], strides = [1, 1]} : vector<2x64xf32> to vector<1x64xf32>
    %143 = vector.broadcast %142 : vector<1x64xf32> to vector<2x64xf32>
    %144 = arith.addf %141, %143 : vector<2x64xf32>
    %145 = vector.extract_strided_slice %134 {offsets = [1, 0], sizes = [1, 64], strides = [1, 1]} : vector<2x64xf32> to vector<1x64xf32>
    %cst_68 = arith.constant 0.000000e+00 : f32
    %146 = vector.broadcast %cst_68 : f32 to vector<2x64xf32>
    %147 = arith.cmpf ogt, %144, %146 : vector<2x64xf32>
    %148 = vector.broadcast %145 : vector<1x64xf32> to vector<2x64xf32>
    %149 = arith.mulf %148, %144 : vector<2x64xf32>
    %150 = arith.select %147, %144, %149 : vector<2x64xi1>, vector<2x64xf32>
    %c0_69 = arith.constant 0 : index
    %c0_70 = arith.constant 0 : index
    %151 = vector.load %arg19[%c0_69, %c0_70] : memref<64x1xf32, #tpu.memory_space<vmem>>, vector<64x1xf32>
    %c0_71 = arith.constant 0 : index
    %c0_72 = arith.constant 0 : index
    %152 = vector.load %arg20[%c0_71, %c0_72] : memref<1x1xf32, #tpu.memory_space<vmem>>, vector<1x1xf32>
    %cst_73 = arith.constant dense<0.000000e+00> : vector<2x1xf32>
    %153 = tpu.matmul %150, %151, %cst_73 {dimension_numbers = #tpu.dot_dimension_numbers<[1], [0], [0], [1], [0, 0, 1, 1], [], []>} : vector<2x64xf32>, vector<64x1xf32>, vector<2x1xf32> -> vector<2x1xf32>
    %154 = vector.broadcast %152 : vector<1x1xf32> to vector<2x1xf32>
    %155 = arith.addf %153, %154 : vector<2x1xf32>
    %c0_74 = arith.constant 0 : index
    %c0_75 = arith.constant 0 : index
    %156 = vector.load %arg21[%c0_74, %c0_75] : memref<2x1xf32, #tpu.memory_space<vmem>>, vector<2x1xf32>
    tpu.vector_store %arg21[%c0_74, %c0_75], %155 {strides = array<i32>} : memref<2x1xf32, #tpu.memory_space<vmem>>, vector<2x1xf32>,
    return
  }
}

</mosaic_0001>

<llo_original>
// kernel: forward.1
$region0: #{forward.1}
  #allocation0 [shape = 'u32[]', space=smem, size = 0x4, offset = 0x4, fixed_abs, tag = 'smem constant byte address 0x4 - core index']
  #allocation1 [shape = 'u32[72,128]{1,0:T(1,128)}', space=vmem, size = 0x9000, scoped, tag = 'internal scratch']
  #allocation2 [shape = 'f32[1,1]{1,0:T(1,128)S(1)}', space=vmem, size = 0x200, scoped, tag = 'scoped memory for forward.1']
  %s0 = inlined_call_operand.vmem [shape: f32[32,8], index: 0, kind: input, shape index: {}]
  %s1 = inlined_call_operand.vmem [shape: f32[32,32], index: 1, kind: input, shape index: {}]
  %s2 = inlined_call_operand.vmem [shape: f32[2,32], index: 2, kind: input, shape index: {}]
  %s3 = inlined_call_operand.vmem [shape: f32[2,32], index: 3, kind: input, shape index: {}]
  %s4 = inlined_call_operand.vmem [shape: f32[2,6], index: 4, kind: input, shape index: {}]
  %s5 = inlined_call_operand.vmem [shape: f32[2,5], index: 5, kind: input, shape index: {}]
  %s6 = inlined_call_operand.vmem [shape: f32[8,16], index: 6, kind: input, shape index: {}]
  %s7 = inlined_call_operand.vmem [shape: f32[5,16], index: 7, kind: input, shape index: {}]
  %s8 = inlined_call_operand.vmem [shape: f32[16,32], index: 8, kind: input, shape index: {}]
  %s9 = inlined_call_operand.vmem [shape: f32[5,32], index: 9, kind: input, shape index: {}]
  %s10 = inlined_call_operand.vmem [shape: f32[6,16], index: 10, kind: input, shape index: {}]
  %s11 = inlined_call_operand.vmem [shape: f32[2,16], index: 11, kind: input, shape index: {}]
  %s12 = inlined_call_operand.vmem [shape: f32[5,16], index: 12, kind: input, shape index: {}]
  %s13 = inlined_call_operand.vmem [shape: f32[2,16], index: 13, kind: input, shape index: {}]
  %s14 = inlined_call_operand.vmem [shape: f32[32,64], index: 14, kind: input, shape index: {}]
  %s15 = inlined_call_operand.vmem [shape: f32[32,64], index: 15, kind: input, shape index: {}]
  %s16 = inlined_call_operand.vmem [shape: f32[16,64], index: 16, kind: input, shape index: {}]
  %s17 = inlined_call_operand.vmem [shape: f32[16,64], index: 17, kind: input, shape index: {}]
  %s18 = inlined_call_operand.vmem [shape: f32[2,64], index: 18, kind: input, shape index: {}]
  %s19 = inlined_call_operand.vmem [shape: f32[64,1], index: 19, kind: input, shape index: {}]
  %s20 = inlined_call_operand.<no memory space> [shape: f32[1,1], index: 20, kind: input, shape index: {}]
  %s21 = inlined_call_operand.vmem [shape: f32[2,1], index: 21, kind: output, shape index: {}]
  %s22 = sld [smem:[#allocation0]]
  $region94: #{forward.1} parent=0
    _
  %s24 = ssub.s32 1, %s22
  %s25 = scalar_select 0, %s24, %s22
  %v26 = vstv %s20
  %27 = vst [vmem:[#allocation2] sm:$0x1] %v26
  // Predicated region
  $region2: #{forward.1} parent=0 // pred_check
    _
  $region3: #{forward.1} parent=0 // pred_check_branch
    %29 = sbr.rel (0) target = $region5
  $region4: #{forward.1} parent=0 // pred_region
    _
  $region5: #{forward.1} parent=0 // pred_fallthru
    _
  // Predicated region
  $region6: #{forward.1} parent=0 // pred_check
    _
  $region7: #{forward.1} parent=0 // pred_check_branch
    %31 = sbr.rel (0) target = $region9
  $region8: #{forward.1} parent=0 // pred_region
    _
  $region9: #{forward.1} parent=0 // pred_fallthru
    _
  // Predicated region
  $region10: #{forward.1} parent=0 // pred_check
    _
  $region11: #{forward.1} parent=0 // pred_check_branch
    %33 = sbr.rel (0) target = $region13
  $region12: #{forward.1} parent=0 // pred_region
    _
  $region13: #{forward.1} parent=0 // pred_fallthru
    _
  // Predicated region
  $region14: #{forward.1} parent=0 // pred_check
    _
  $region15: #{forward.1} parent=0 // pred_check_branch
    %35 = sbr.rel (0) target = $region17
  $region16: #{forward.1} parent=0 // pred_region
    _
  $region17: #{forward.1} parent=0 // pred_fallthru
    _
  // Predicated region
  $region18: #{forward.1} parent=0 // pred_check
    _
  $region19: #{forward.1} parent=0 // pred_check_branch
    %37 = sbr.rel (0) target = $region21
  $region20: #{forward.1} parent=0 // pred_region
    _
  $region21: #{forward.1} parent=0 // pred_fallthru
    _
  // Predicated region
  $region22: #{forward.1} parent=0 // pred_check
    _
  $region23: #{forward.1} parent=0 // pred_check_branch
    %39 = sbr.rel (0) target = $region25
  $region24: #{forward.1} parent=0 // pred_region
    _
  $region25: #{forward.1} parent=0 // pred_fallthru
    _
  // Predicated region
  $region26: #{forward.1} parent=0 // pred_check
    _
  $region27: #{forward.1} parent=0 // pred_check_branch
    %41 = sbr.rel (0) target = $region29
  $region28: #{forward.1} parent=0 // pred_region
    _
  $region29: #{forward.1} parent=0 // pred_fallthru
    _
  // Predicated region
  $region30: #{forward.1} parent=0 // pred_check
    _
  $region31: #{forward.1} parent=0 // pred_check_branch
    %43 = sbr.rel (0) target = $region33
  $region32: #{forward.1} parent=0 // pred_region
    _
  $region33: #{forward.1} parent=0 // pred_fallthru
    _
  // Predicated region
  $region34: #{forward.1} parent=0 // pred_check
    _
  $region35: #{forward.1} parent=0 // pred_check_branch
    %45 = sbr.rel (0) target = $region37
  $region36: #{forward.1} parent=0 // pred_region
    _
  $region37: #{forward.1} parent=0 // pred_fallthru
    _
  // Predicated region
  $region38: #{forward.1} parent=0 // pred_check
    _
  $region39: #{forward.1} parent=0 // pred_check_branch
    %47 = sbr.rel (0) target = $region41
  $region40: #{forward.1} parent=0 // pred_region
    _
  $region41: #{forward.1} parent=0 // pred_fallthru
    _
  // Predicated region
  $region42: #{forward.1} parent=0 // pred_check
    _
  $region43: #{forward.1} parent=0 // pred_check_branch
    %49 = sbr.rel (0) target = $region45
  $region44: #{forward.1} parent=0 // pred_region
    _
  $region45: #{forward.1} parent=0 // pred_fallthru
    _
  // Predicated region
  $region46: #{forward.1} parent=0 // pred_check
    _
  $region47: #{forward.1} parent=0 // pred_check_branch
    %51 = sbr.rel (0) target = $region49
  $region48: #{forward.1} parent=0 // pred_region
    _
  $region49: #{forward.1} parent=0 // pred_fallthru
    _
  // Predicated region
  $region50: #{forward.1} parent=0 // pred_check
    _
  $region51: #{forward.1} parent=0 // pred_check_branch
    %53 = sbr.rel (0) target = $region53
  $region52: #{forward.1} parent=0 // pred_region
    _
  $region53: #{forward.1} parent=0 // pred_fallthru
    _
  // Predicated region
  $region54: #{forward.1} parent=0 // pred_check
    _
  $region55: #{forward.1} parent=0 // pred_check_branch
    %55 = sbr.rel (0) target = $region57
  $region56: #{forward.1} parent=0 // pred_region
    _
  $region57: #{forward.1} parent=0 // pred_fallthru
    _
  // Predicated region
  $region58: #{forward.1} parent=0 // pred_check
    _
  $region59: #{forward.1} parent=0 // pred_check_branch
    %57 = sbr.rel (0) target = $region61
  $region60: #{forward.1} parent=0 // pred_region
    _
  $region61: #{forward.1} parent=0 // pred_fallthru
    _
  // Predicated region
  $region62: #{forward.1} parent=0 // pred_check
    _
  $region63: #{forward.1} parent=0 // pred_check_branch
    %59 = sbr.rel (0) target = $region65
  $region64: #{forward.1} parent=0 // pred_region
    _
  $region65: #{forward.1} parent=0 // pred_fallthru
    _
  // Predicated region
  $region66: #{forward.1} parent=0 // pred_check
    _
  $region67: #{forward.1} parent=0 // pred_check_branch
    %61 = sbr.rel (0) target = $region69
  $region68: #{forward.1} parent=0 // pred_region
    _
  $region69: #{forward.1} parent=0 // pred_fallthru
    _
  // Predicated region
  $region70: #{forward.1} parent=0 // pred_check
    _
  $region71: #{forward.1} parent=0 // pred_check_branch
    %63 = sbr.rel (0) target = $region73
  $region72: #{forward.1} parent=0 // pred_region
    _
  $region73: #{forward.1} parent=0 // pred_fallthru
    _
  // Predicated region
  $region74: #{forward.1} parent=0 // pred_check
    _
  $region75: #{forward.1} parent=0 // pred_check_branch
    %65 = sbr.rel (0) target = $region77
  $region76: #{forward.1} parent=0 // pred_region
    _
  $region77: #{forward.1} parent=0 // pred_fallthru
    _
  // Predicated region
  $region78: #{forward.1} parent=0 // pred_check
    _
  $region79: #{forward.1} parent=0 // pred_check_branch
    %67 = sbr.rel (0) target = $region81
  $region80: #{forward.1} parent=0 // pred_region
    _
  $region81: #{forward.1} parent=0 // pred_fallthru
    _
  // Predicated region
  $region82: #{forward.1} parent=0 // pred_check
    _
  $region83: #{forward.1} parent=0 // pred_check_branch
    %69 = sbr.rel (0) target = $region85
  $region84: #{forward.1} parent=0 // pred_region
    _
  $region85: #{forward.1} parent=0 // pred_fallthru
    _
  %v70 = vld [vmem:[%s0] sm:$0xff]
  %v71 = vld [vmem:[%s0 + $0x8] sm:$0xff]
  %v72 = vld [vmem:[%s0 + $0x10] sm:$0xff]
  %v73 = vld [vmem:[%s0 + $0x18] sm:$0xff]
  %v74 = vld [vmem:[%s1] sm:$0xff]
  %v75 = vld [vmem:[%s1 + $0x8] sm:$0xff]
  %v76 = vld [vmem:[%s1 + $0x10] sm:$0xff]
  %v77 = vld [vmem:[%s1 + $0x18] sm:$0xff]
  %v78 = vld [vmem:[%s2] sm:$0x3]
  %v79 = vld [vmem:[%s3] sm:$0x3]
  %v80 = vld [vmem:[%s4] sm:$0x3]
  %v81 = vld [vmem:[%s5] sm:$0x3]
  %v82 = vld [vmem:[%s6] sm:$0xff]
  %v83 = vld [vmem:[%s7] sm:$0x1f]
  %vm84 = vcmask 64512
  %v86 = vsel %vm84, %v70, 0
  %v89 = vsel %vm84, %v71, 0
  %v92 = vsel %vm84, %v72, 0
  %v95 = vsel %vm84, %v73, 0
  %97 = vmatpush.msra.mxu0 0.0
  %98 = vmatpush.msra.mxu0 0.0
  %99 = vmatpush.msra.mxu0 0.0
  %100 = vmatpush.msra.mxu0 0.0
  %101 = vmatpush.msra.mxu0 0.0
  %102 = vmatpush.msra.mxu0 0.0
  %103 = vmatpush.msra.mxu0 0.0
  %104 = vmatpush.msra.mxu0 0.0
  %105 = vmatpush.msra.mxu0 0.0
  %106 = vmatpush.msra.mxu0 0.0
  %107 = vmatpush.msra.mxu0 0.0
  %108 = vmatpush.msra.mxu0 0.0
  %109 = vmatpush.msra.mxu0 0.0
  %110 = vmatpush.msra.mxu0 0.0
  %111 = vmatpush.msra.mxu0 0.0
  %112 = vmatpush.msra.mxu0 %v82
  %113 = vmatmul.f32.gmra.mxu0 %v86
  %v114 = vpop.f32.mrf.mxu0
  %v115 = vadd.f32 0.0, %v114
  %116 = vmatmul.f32.gmra.mxu0 %v89
  %v117 = vpop.f32.mrf.mxu0
  %v118 = vadd.f32 0.0, %v117
  %119 = vmatmul.f32.gmra.mxu0 %v92
  %v120 = vpop.f32.mrf.mxu0
  %v121 = vadd.f32 0.0, %v120
  %122 = vmatmul.f32.gmra.mxu0 %v95
  %v123 = vpop.f32.mrf.mxu0
  %v124 = vadd.f32 0.0, %v123
  %125 = vdwg.mxu0
  %v126 = vperm.slane %v83, 0
  %v127 = vmul.f32 %v115, %v126
  %v128 = vmul.f32 %v118, %v126
  %v129 = vmul.f32 %v121, %v126
  %v130 = vmul.f32 %v124, %v126
  %vm131 = vcmask 130048
  %v132 = vsel %vm131, %v127, 0.0
  %133 = vadd.xlane.f32.xlu0 %v132
  %v134 = vpop.xlane.xlu0 %133
  %v135 = vsel %vm131, %v128, 0.0
  %136 = vadd.xlane.f32.xlu0 %v135
  %v137 = vpop.xlane.xlu0 %136
  %v138 = vsel %vm131, %v129, 0.0
  %139 = vadd.xlane.f32.xlu0 %v138
  %v140 = vpop.xlane.xlu0 %139
  %v141 = vsel %vm131, %v130, 0.0
  %142 = vadd.xlane.f32.xlu0 %v141
  %v143 = vpop.xlane.xlu0 %142
  %v144 = vperm.slane %v83, 1
  %v145 = vmul.f32 %v115, %v144
  %v146 = vmul.f32 %v118, %v144
  %v147 = vmul.f32 %v121, %v144
  %v148 = vmul.f32 %v124, %v144
  %v149 = vsel %vm131, %v145, 0.0
  %150 = vadd.xlane.f32.xlu0 %v149
  %v151 = vpop.xlane.xlu0 %150
  %v152 = vsel %vm131, %v146, 0.0
  %153 = vadd.xlane.f32.xlu0 %v152
  %v154 = vpop.xlane.xlu0 %153
  %v155 = vsel %vm131, %v147, 0.0
  %156 = vadd.xlane.f32.xlu0 %v155
  %v157 = vpop.xlane.xlu0 %156
  %v158 = vsel %vm131, %v148, 0.0
  %159 = vadd.xlane.f32.xlu0 %v158
  %v160 = vpop.xlane.xlu0 %159
  %161 = vxpose.xlu0.b32.start [1/16] %v134, 128
  %162 = vxpose.xlu0.b32.cont [2/16] %v137, 128
  %163 = vxpose.xlu0.b32.cont [3/16] %v140, 128
  %164 = vxpose.xlu0.b32.cont [4/16] %v143, 128
  %165 = vxpose.xlu0.b32.cont [5/16] 0.0, 128
  %166 = vxpose.xlu0.b32.cont [6/16] 0.0, 128
  %167 = vxpose.xlu0.b32.cont [7/16] 0.0, 128
  %168 = vxpose.xlu0.b32.cont [8/16] 0.0, 128
  %169 = vxpose.xlu0.b32.cont [9/16] 0.0, 128
  %170 = vxpose.xlu0.b32.cont [10/16] 0.0, 128
  %171 = vxpose.xlu0.b32.cont [11/16] 0.0, 128
  %172 = vxpose.xlu0.b32.cont [12/16] 0.0, 128
  %173 = vxpose.xlu0.b32.cont [13/16] 0.0, 128
  %174 = vxpose.xlu0.b32.cont [14/16] 0.0, 128
  %175 = vxpose.xlu0.b32.cont [15/16] 0.0, 128
  %176 = vxpose.xlu0.b32.end [16/16] 0.0, 128
  %v177 = vpop.trf.xlu0
  %v178 = vpop.trf.xlu0
  %v179 = vpop.trf.xlu0
  %v180 = vpop.trf.xlu0
  %v181 = vpop.trf.xlu0
  %v182 = vpop.trf.xlu0
  %v183 = vpop.trf.xlu0
  %v184 = vpop.trf.xlu0
  %v185 = vpop.trf.xlu0
  %v186 = vpop.trf.xlu0
  %v187 = vpop.trf.xlu0
  %v188 = vpop.trf.xlu0
  %v189 = vpop.trf.xlu0
  %v190 = vpop.trf.xlu0
  %v191 = vpop.trf.xlu0
  %v192 = vpop.trf.xlu0
  %v193 = vperm.slane %v177, 0
  %v194 = vadd.f32 %v151, %v193
  %v195 = vadd.f32 %v154, %v193
  %v196 = vadd.f32 %v157, %v193
  %v197 = vadd.f32 %v160, %v193
  %vm198 = vcmp.gt.f32.partialorder %v194, 0.0
  %vm199 = vcmp.gt.f32.partialorder %v195, 0.0
  %vm200 = vcmp.gt.f32.partialorder %v196, 0.0
  %vm201 = vcmp.gt.f32.partialorder %v197, 0.0
  %v202 = vmul.f32 %v194, 0.2
  %v203 = vmul.f32 %v195, 0.2
  %v204 = vmul.f32 %v196, 0.2
  %v205 = vmul.f32 %v197, 0.2
  %v206 = vsel %vm198, %v194, %v202
  %v207 = vsel %vm199, %v195, %v203
  %v208 = vsel %vm200, %v196, %v204
  %v209 = vsel %vm201, %v197, %v205
  %vm210 = vcmp.gt.f32.partialorder %v74, 0.0
  %vm211 = vcmp.gt.f32.partialorder %v75, 0.0
  %vm212 = vcmp.gt.f32.partialorder %v76, 0.0
  %vm213 = vcmp.gt.f32.partialorder %v77, 0.0
  %v214 = vsel %vm210, %v206, -1e+30
  %v215 = vsel %vm211, %v207, -1e+30
  %v216 = vsel %vm212, %v208, -1e+30
  %v217 = vsel %vm213, %v209, -1e+30
  %vm218 = vcmask 261120
  %v219 = vsel %vm218, %v214, -inf
  %220 = vmax.xlane.f32.xlu0 %v219
  %v221 = vpop.xlane.xlu0 %220
  %v222 = vsel %vm218, %v215, -inf
  %223 = vmax.xlane.f32.xlu0 %v222
  %v224 = vpop.xlane.xlu0 %223
  %v225 = vsel %vm218, %v216, -inf
  %226 = vmax.xlane.f32.xlu0 %v225
  %v227 = vpop.xlane.xlu0 %226
  %v228 = vsel %vm218, %v217, -inf
  %229 = vmax.xlane.f32.xlu0 %v228
  %v230 = vpop.xlane.xlu0 %229
  %v231 = vsub.f32 %v214, %v221
  %v232 = vsub.f32 %v215, %v224
  %v233 = vsub.f32 %v216, %v227
  %v234 = vsub.f32 %v217, %v230
  %v235 = vmul.f32 %v231, 1.442695
  %v236 = vpow.pop %v235
  %v237 = vmul.f32 %v232, 1.442695
  %v238 = vpow.pop %v237
  %v239 = vmul.f32 %v233, 1.442695
  %v240 = vpow.pop %v239
  %v241 = vmul.f32 %v234, 1.442695
  %v242 = vpow.pop %v241
  %v243 = vsel %vm218, %v236, 0.0
  %244 = vadd.xlane.f32.xlu0 %v243
  %v245 = vpop.xlane.xlu0 %244
  %v246 = vsel %vm218, %v238, 0.0
  %247 = vadd.xlane.f32.xlu0 %v246
  %v248 = vpop.xlane.xlu0 %247
  %v249 = vsel %vm218, %v240, 0.0
  %250 = vadd.xlane.f32.xlu0 %v249
  %v251 = vpop.xlane.xlu0 %250
  %v252 = vsel %vm218, %v242, 0.0
  %253 = vadd.xlane.f32.xlu0 %v252
  %v254 = vpop.xlane.xlu0 %253
  %v255 = vrcp.pop %v245
  %v256 = vrcp.pop %v248
  %v257 = vrcp.pop %v251
  %v258 = vrcp.pop %v254
  %v259 = vmul.f32 %v236, %v255
  %v260 = vmul.f32 %v238, %v256
  %v261 = vmul.f32 %v240, %v257
  %v262 = vmul.f32 %v242, %v258
  %v264 = vsel %vm218, %v259, 0
  %v267 = vsel %vm218, %v260, 0
  %v270 = vsel %vm218, %v261, 0
  %v273 = vsel %vm218, %v262, 0
  %275 = vmatpush.msra.mxu0 0.0
  %276 = vmatpush.msra.mxu0 0.0
  %277 = vmatpush.msra.mxu0 0.0
  %278 = vmatpush.msra.mxu0 0.0
  %279 = vmatpush.msra.mxu0 0.0
  %280 = vmatpush.msra.mxu0 0.0
  %281 = vmatpush.msra.mxu0 0.0
  %282 = vmatpush.msra.mxu0 0.0
  %283 = vmatpush.msra.mxu0 0.0
  %284 = vmatpush.msra.mxu0 0.0
  %285 = vmatpush.msra.mxu0 0.0
  %286 = vmatpush.msra.mxu0 0.0
  %287 = vmatpush.msra.mxu0 %v124
  %288 = vmatpush.msra.mxu0 %v121
  %289 = vmatpush.msra.mxu0 %v118
  %290 = vmatpush.msra.mxu0 %v115
  %291 = vmatmul.f32.gmra.mxu0 %v264
  %v292 = vpop.f32.mrf.mxu0
  %v293 = vadd.f32 0.0, %v292
  %294 = vmatmul.f32.gmra.mxu0 %v267
  %v295 = vpop.f32.mrf.mxu0
  %v296 = vadd.f32 0.0, %v295
  %297 = vmatmul.f32.gmra.mxu0 %v270
  %v298 = vpop.f32.mrf.mxu0
  %v299 = vadd.f32 0.0, %v298
  %300 = vmatmul.f32.gmra.mxu0 %v273
  %v301 = vpop.f32.mrf.mxu0
  %v302 = vadd.f32 0.0, %v301
  %303 = vdwg.mxu0
  %v304 = vperm.slane %v83, 2
  %v305 = vmul.f32 %v293, %v304
  %v306 = vmul.f32 %v296, %v304
  %v307 = vmul.f32 %v299, %v304
  %v308 = vmul.f32 %v302, %v304
  %v309 = vperm.slane %v83, 3
  %v310 = vadd.f32 %v305, %v309
  %v311 = vadd.f32 %v306, %v309
  %v312 = vadd.f32 %v307, %v309
  %v313 = vadd.f32 %v308, %v309
  %vm314 = vcmp.gt.f32.partialorder %v310, 0.0
  %vm315 = vcmp.gt.f32.partialorder %v311, 0.0
  %vm316 = vcmp.gt.f32.partialorder %v312, 0.0
  %vm317 = vcmp.gt.f32.partialorder %v313, 0.0
  %v318 = vperm.slane %v83, 4
  %v319 = vmul.f32 %v318, %v310
  %v320 = vmul.f32 %v318, %v311
  %v321 = vmul.f32 %v318, %v312
  %v322 = vmul.f32 %v318, %v313
  %v323 = vsel %vm314, %v310, %v319
  %v324 = vsel %vm315, %v311, %v320
  %v325 = vsel %vm316, %v312, %v321
  %v326 = vsel %vm317, %v313, %v322
  %v327 = vld [vmem:[%s8] sm:$0xff]
  %v328 = vld [vmem:[%s8 + $0x8] sm:$0xff]
  %v329 = vld [vmem:[%s9] sm:$0x1f]
  %v331 = vsel %vm131, %v323, 0
  %v334 = vsel %vm131, %v324, 0
  %v337 = vsel %vm131, %v325, 0
  %v340 = vsel %vm131, %v326, 0
  %342 = vmatpush.msra.mxu0 0.0
  %343 = vmatpush.msra.mxu0 0.0
  %344 = vmatpush.msra.mxu0 0.0
  %345 = vmatpush.msra.mxu0 0.0
  %346 = vmatpush.msra.mxu0 0.0
  %347 = vmatpush.msra.mxu0 0.0
  %348 = vmatpush.msra.mxu0 0.0
  %349 = vmatpush.msra.mxu0 0.0
  %350 = vmatpush.msra.mxu0 0.0
  %351 = vmatpush.msra.mxu0 0.0
  %352 = vmatpush.msra.mxu0 0.0
  %353 = vmatpush.msra.mxu0 0.0
  %354 = vmatpush.msra.mxu0 0.0
  %355 = vmatpush.msra.mxu0 0.0
  %356 = vmatpush.msra.mxu0 %v328
  %357 = vmatpush.msra.mxu0 %v327
  %358 = vmatmul.f32.gmra.mxu0 %v331
  %v359 = vpop.f32.mrf.mxu0
  %v360 = vadd.f32 0.0, %v359
  %361 = vmatmul.f32.gmra.mxu0 %v334
  %v362 = vpop.f32.mrf.mxu0
  %v363 = vadd.f32 0.0, %v362
  %364 = vmatmul.f32.gmra.mxu0 %v337
  %v365 = vpop.f32.mrf.mxu0
  %v366 = vadd.f32 0.0, %v365
  %367 = vmatmul.f32.gmra.mxu0 %v340
  %v368 = vpop.f32.mrf.mxu0
  %v369 = vadd.f32 0.0, %v368
  %370 = vdwg.mxu0
  %v371 = vperm.slane %v329, 0
  %v372 = vmul.f32 %v360, %v371
  %v373 = vmul.f32 %v363, %v371
  %v374 = vmul.f32 %v366, %v371
  %v375 = vmul.f32 %v369, %v371
  %v376 = vsel %vm218, %v372, 0.0
  %377 = vadd.xlane.f32.xlu0 %v376
  %v378 = vpop.xlane.xlu0 %377
  %v379 = vsel %vm218, %v373, 0.0
  %380 = vadd.xlane.f32.xlu0 %v379
  %v381 = vpop.xlane.xlu0 %380
  %v382 = vsel %vm218, %v374, 0.0
  %383 = vadd.xlane.f32.xlu0 %v382
  %v384 = vpop.xlane.xlu0 %383
  %v385 = vsel %vm218, %v375, 0.0
  %386 = vadd.xlane.f32.xlu0 %v385
  %v387 = vpop.xlane.xlu0 %386
  %v388 = vperm.slane %v329, 1
  %v389 = vmul.f32 %v360, %v388
  %v390 = vmul.f32 %v363, %v388
  %v391 = vmul.f32 %v366, %v388
  %v392 = vmul.f32 %v369, %v388
  %v393 = vsel %vm218, %v389, 0.0
  %394 = vadd.xlane.f32.xlu0 %v393
  %v395 = vpop.xlane.xlu0 %394
  %v396 = vsel %vm218, %v390, 0.0
  %397 = vadd.xlane.f32.xlu0 %v396
  %v398 = vpop.xlane.xlu0 %397
  %v399 = vsel %vm218, %v391, 0.0
  %400 = vadd.xlane.f32.xlu0 %v399
  %v401 = vpop.xlane.xlu0 %400
  %v402 = vsel %vm218, %v392, 0.0
  %403 = vadd.xlane.f32.xlu0 %v402
  %v404 = vpop.xlane.xlu0 %403
  %405 = vxpose.xlu0.b32.start [1/16] %v378, 128
  %406 = vxpose.xlu0.b32.cont [2/16] %v381, 128
  %407 = vxpose.xlu0.b32.cont [3/16] %v384, 128
  %408 = vxpose.xlu0.b32.cont [4/16] %v387, 128
  %409 = vxpose.xlu0.b32.cont [5/16] 0.0, 128
  %410 = vxpose.xlu0.b32.cont [6/16] 0.0, 128
  %411 = vxpose.xlu0.b32.cont [7/16] 0.0, 128
  %412 = vxpose.xlu0.b32.cont [8/16] 0.0, 128
  %413 = vxpose.xlu0.b32.cont [9/16] 0.0, 128
  %414 = vxpose.xlu0.b32.cont [10/16] 0.0, 128
  %415 = vxpose.xlu0.b32.cont [11/16] 0.0, 128
  %416 = vxpose.xlu0.b32.cont [12/16] 0.0, 128
  %417 = vxpose.xlu0.b32.cont [13/16] 0.0, 128
  %418 = vxpose.xlu0.b32.cont [14/16] 0.0, 128
  %419 = vxpose.xlu0.b32.cont [15/16] 0.0, 128
  %420 = vxpose.xlu0.b32.end [16/16] 0.0, 128
  %v421 = vpop.trf.xlu0
  %v422 = vpop.trf.xlu0
  %v423 = vpop.trf.xlu0
  %v424 = vpop.trf.xlu0
  %v425 = vpop.trf.xlu0
  %v426 = vpop.trf.xlu0
  %v427 = vpop.trf.xlu0
  %v428 = vpop.trf.xlu0
  %v429 = vpop.trf.xlu0
  %v430 = vpop.trf.xlu0
  %v431 = vpop.trf.xlu0
  %v432 = vpop.trf.xlu0
  %v433 = vpop.trf.xlu0
  %v434 = vpop.trf.xlu0
  %v435 = vpop.trf.xlu0
  %v436 = vpop.trf.xlu0
  %v437 = vperm.slane %v421, 0
  %v438 = vadd.f32 %v395, %v437
  %v439 = vadd.f32 %v398, %v437
  %v440 = vadd.f32 %v401, %v437
  %v441 = vadd.f32 %v404, %v437
  %vm442 = vcmp.gt.f32.partialorder %v438, 0.0
  %vm443 = vcmp.gt.f32.partialorder %v439, 0.0
  %vm444 = vcmp.gt.f32.partialorder %v440, 0.0
  %vm445 = vcmp.gt.f32.partialorder %v441, 0.0
  %v446 = vmul.f32 %v438, 0.2
  %v447 = vmul.f32 %v439, 0.2
  %v448 = vmul.f32 %v440, 0.2
  %v449 = vmul.f32 %v441, 0.2
  %v450 = vsel %vm442, %v438, %v446
  %v451 = vsel %vm443, %v439, %v447
  %v452 = vsel %vm444, %v440, %v448
  %v453 = vsel %vm445, %v441, %v449
  %v454 = vsel %vm210, %v450, -1e+30
  %v455 = vsel %vm211, %v451, -1e+30
  %v456 = vsel %vm212, %v452, -1e+30
  %v457 = vsel %vm213, %v453, -1e+30
  %v458 = vsel %vm218, %v454, -inf
  %459 = vmax.xlane.f32.xlu0 %v458
  %v460 = vpop.xlane.xlu0 %459
  %v461 = vsel %vm218, %v455, -inf
  %462 = vmax.xlane.f32.xlu0 %v461
  %v463 = vpop.xlane.xlu0 %462
  %v464 = vsel %vm218, %v456, -inf
  %465 = vmax.xlane.f32.xlu0 %v464
  %v466 = vpop.xlane.xlu0 %465
  %v467 = vsel %vm218, %v457, -inf
  %468 = vmax.xlane.f32.xlu0 %v467
  %v469 = vpop.xlane.xlu0 %468
  %v470 = vsub.f32 %v454, %v460
  %v471 = vsub.f32 %v455, %v463
  %v472 = vsub.f32 %v456, %v466
  %v473 = vsub.f32 %v457, %v469
  %v474 = vmul.f32 %v470, 1.442695
  %v475 = vpow.pop %v474
  %v476 = vmul.f32 %v471, 1.442695
  %v477 = vpow.pop %v476
  %v478 = vmul.f32 %v472, 1.442695
  %v479 = vpow.pop %v478
  %v480 = vmul.f32 %v473, 1.442695
  %v481 = vpow.pop %v480
  %v482 = vsel %vm218, %v475, 0.0
  %483 = vadd.xlane.f32.xlu0 %v482
  %v484 = vpop.xlane.xlu0 %483
  %v485 = vsel %vm218, %v477, 0.0
  %486 = vadd.xlane.f32.xlu0 %v485
  %v487 = vpop.xlane.xlu0 %486
  %v488 = vsel %vm218, %v479, 0.0
  %489 = vadd.xlane.f32.xlu0 %v488
  %v490 = vpop.xlane.xlu0 %489
  %v491 = vsel %vm218, %v481, 0.0
  %492 = vadd.xlane.f32.xlu0 %v491
  %v493 = vpop.xlane.xlu0 %492
  %v494 = vrcp.pop %v484
  %v495 = vrcp.pop %v487
  %v496 = vrcp.pop %v490
  %v497 = vrcp.pop %v493
  %v498 = vmul.f32 %v475, %v494
  %v499 = vmul.f32 %v477, %v495
  %v500 = vmul.f32 %v479, %v496
  %v501 = vmul.f32 %v481, %v497
  %v503 = vsel %vm218, %v498, 0
  %v506 = vsel %vm218, %v499, 0
  %v509 = vsel %vm218, %v500, 0
  %v512 = vsel %vm218, %v501, 0
  %514 = vmatpush.msra.mxu0 0.0
  %515 = vmatpush.msra.mxu0 0.0
  %516 = vmatpush.msra.mxu0 0.0
  %517 = vmatpush.msra.mxu0 0.0
  %518 = vmatpush.msra.mxu0 0.0
  %519 = vmatpush.msra.mxu0 0.0
  %520 = vmatpush.msra.mxu0 0.0
  %521 = vmatpush.msra.mxu0 0.0
  %522 = vmatpush.msra.mxu0 0.0
  %523 = vmatpush.msra.mxu0 0.0
  %524 = vmatpush.msra.mxu0 0.0
  %525 = vmatpush.msra.mxu0 0.0
  %526 = vmatpush.msra.mxu0 %v369
  %527 = vmatpush.msra.mxu0 %v366
  %528 = vmatpush.msra.mxu0 %v363
  %529 = vmatpush.msra.mxu0 %v360
  %530 = vmatmul.f32.gmra.mxu0 %v503
  %v531 = vpop.f32.mrf.mxu0
  %v532 = vadd.f32 0.0, %v531
  %533 = vmatmul.f32.gmra.mxu0 %v506
  %v534 = vpop.f32.mrf.mxu0
  %v535 = vadd.f32 0.0, %v534
  %536 = vmatmul.f32.gmra.mxu0 %v509
  %v537 = vpop.f32.mrf.mxu0
  %v538 = vadd.f32 0.0, %v537
  %539 = vmatmul.f32.gmra.mxu0 %v512
  %v540 = vpop.f32.mrf.mxu0
  %v541 = vadd.f32 0.0, %v540
  %542 = vdwg.mxu0
  %v543 = vperm.slane %v329, 2
  %v544 = vmul.f32 %v532, %v543
  %v545 = vmul.f32 %v535, %v543
  %v546 = vmul.f32 %v538, %v543
  %v547 = vmul.f32 %v541, %v543
  %v548 = vperm.slane %v329, 3
  %v549 = vadd.f32 %v544, %v548
  %v550 = vadd.f32 %v545, %v548
  %v551 = vadd.f32 %v546, %v548
  %v552 = vadd.f32 %v547, %v548
  %vm553 = vcmp.gt.f32.partialorder %v549, 0.0
  %vm554 = vcmp.gt.f32.partialorder %v550, 0.0
  %vm555 = vcmp.gt.f32.partialorder %v551, 0.0
  %vm556 = vcmp.gt.f32.partialorder %v552, 0.0
  %v557 = vperm.slane %v329, 4
  %v558 = vmul.f32 %v557, %v549
  %v559 = vmul.f32 %v557, %v550
  %v560 = vmul.f32 %v557, %v551
  %v561 = vmul.f32 %v557, %v552
  %v562 = vsel %vm553, %v549, %v558
  %v563 = vsel %vm554, %v550, %v559
  %v564 = vsel %vm555, %v551, %v560
  %v565 = vsel %vm556, %v552, %v561
  %v567 = vsel %vm218, %v78, 0
  %569 = vmatpush.msra.mxu0 0.0
  %570 = vmatpush.msra.mxu0 0.0
  %571 = vmatpush.msra.mxu0 0.0
  %572 = vmatpush.msra.mxu0 0.0
  %573 = vmatpush.msra.mxu0 0.0
  %574 = vmatpush.msra.mxu0 0.0
  %575 = vmatpush.msra.mxu0 0.0
  %576 = vmatpush.msra.mxu0 0.0
  %577 = vmatpush.msra.mxu0 0.0
  %578 = vmatpush.msra.mxu0 0.0
  %579 = vmatpush.msra.mxu0 0.0
  %580 = vmatpush.msra.mxu0 0.0
  %581 = vmatpush.msra.mxu0 %v565
  %582 = vmatpush.msra.mxu0 %v564
  %583 = vmatpush.msra.mxu0 %v563
  %584 = vmatpush.msra.mxu0 %v562
  %585 = vmatmul.f32.gmra.mxu0 %v567
  %v586 = vpop.f32.mrf.mxu0
  %v587 = vadd.f32 0.0, %v586
  %588 = vdwg.mxu0
  %v590 = vsel %vm218, %v79, 0
  %592 = vmatpush.msra.mxu0 0.0
  %593 = vmatpush.msra.mxu0 0.0
  %594 = vmatpush.msra.mxu0 0.0
  %595 = vmatpush.msra.mxu0 0.0
  %596 = vmatpush.msra.mxu0 0.0
  %597 = vmatpush.msra.mxu0 0.0
  %598 = vmatpush.msra.mxu0 0.0
  %599 = vmatpush.msra.mxu0 0.0
  %600 = vmatpush.msra.mxu0 0.0
  %601 = vmatpush.msra.mxu0 0.0
  %602 = vmatpush.msra.mxu0 0.0
  %603 = vmatpush.msra.mxu0 0.0
  %604 = vmatpush.msra.mxu0 %v565
  %605 = vmatpush.msra.mxu0 %v564
  %606 = vmatpush.msra.mxu0 %v563
  %607 = vmatpush.msra.mxu0 %v562
  %608 = vmatmul.f32.gmra.mxu0 %v590
  %v609 = vpop.f32.mrf.mxu0
  %v610 = vadd.f32 0.0, %v609
  %611 = vdwg.mxu0
  %v612 = vld [vmem:[%s10] sm:$0x3f]
  %v613 = vld [vmem:[%s11] sm:$0x3]
  %v614 = vperm.slane %v613, 0
  %vm615 = vcmask 48128
  %v617 = vsel %vm615, %v80, 0
  %vm619 = vcmask 1045504
  %v621 = vsel %vm619, %v612, 0
  %623 = vmatpush.msra.mxu0 0.0
  %624 = vmatpush.msra.mxu0 0.0
  %625 = vmatpush.msra.mxu0 0.0
  %626 = vmatpush.msra.mxu0 0.0
  %627 = vmatpush.msra.mxu0 0.0
  %628 = vmatpush.msra.mxu0 0.0
  %629 = vmatpush.msra.mxu0 0.0
  %630 = vmatpush.msra.mxu0 0.0
  %631 = vmatpush.msra.mxu0 0.0
  %632 = vmatpush.msra.mxu0 0.0
  %633 = vmatpush.msra.mxu0 0.0
  %634 = vmatpush.msra.mxu0 0.0
  %635 = vmatpush.msra.mxu0 0.0
  %636 = vmatpush.msra.mxu0 0.0
  %637 = vmatpush.msra.mxu0 0.0
  %638 = vmatpush.msra.mxu0 %v621
  %639 = vmatmul.f32.gmra.mxu0 %v617
  %v640 = vpop.f32.mrf.mxu0
  %v641 = vadd.f32 %v614, %v640
  %642 = vdwg.mxu0
  %vm643 = vcmp.gt.f32.partialorder %v641, 0.0
  %v644 = vperm.slane %v613, 1
  %v645 = vmul.f32 %v644, %v641
  %v646 = vsel %vm643, %v641, %v645
  %v647 = vld [vmem:[%s12] sm:$0x1f]
  %v648 = vld [vmem:[%s13] sm:$0x3]
  %v649 = vperm.slane %v648, 0
  %vm650 = vcmask 39936
  %v652 = vsel %vm650, %v81, 0
  %vm654 = vcmask 1044480
  %v656 = vsel %vm654, %v647, 0
  %658 = vmatpush.msra.mxu0 0.0
  %659 = vmatpush.msra.mxu0 0.0
  %660 = vmatpush.msra.mxu0 0.0
  %661 = vmatpush.msra.mxu0 0.0
  %662 = vmatpush.msra.mxu0 0.0
  %663 = vmatpush.msra.mxu0 0.0
  %664 = vmatpush.msra.mxu0 0.0
  %665 = vmatpush.msra.mxu0 0.0
  %666 = vmatpush.msra.mxu0 0.0
  %667 = vmatpush.msra.mxu0 0.0
  %668 = vmatpush.msra.mxu0 0.0
  %669 = vmatpush.msra.mxu0 0.0
  %670 = vmatpush.msra.mxu0 0.0
  %671 = vmatpush.msra.mxu0 0.0
  %672 = vmatpush.msra.mxu0 0.0
  %673 = vmatpush.msra.mxu0 %v656
  %674 = vmatmul.f32.gmra.mxu0 %v652
  %v675 = vpop.f32.mrf.mxu0
  %v676 = vadd.f32 %v649, %v675
  %677 = vdwg.mxu0
  %vm678 = vcmp.gt.f32.partialorder %v676, 0.0
  %v679 = vperm.slane %v648, 1
  %v680 = vmul.f32 %v679, %v676
  %v681 = vsel %vm678, %v676, %v680
  %v682 = vld [vmem:[%s14] sm:$0xff]
  %v683 = vld [vmem:[%s14 + $0x8] sm:$0xff]
  %v684 = vld [vmem:[%s14 + $0x10] sm:$0xff]
  %v685 = vld [vmem:[%s14 + $0x18] sm:$0xff]
  %v686 = vld [vmem:[%s15] sm:$0xff]
  %v687 = vld [vmem:[%s15 + $0x8] sm:$0xff]
  %v688 = vld [vmem:[%s15 + $0x10] sm:$0xff]
  %v689 = vld [vmem:[%s15 + $0x18] sm:$0xff]
  %v690 = vld [vmem:[%s16] sm:$0xff]
  %v691 = vld [vmem:[%s16 + $0x8] sm:$0xff]
  %v692 = vld [vmem:[%s17] sm:$0xff]
  %v693 = vld [vmem:[%s17 + $0x8] sm:$0xff]
  %v694 = vld [vmem:[%s18] sm:$0x3]
  %v696 = vsel %vm218, %v610, 0
  %698 = vmatpush.msra.mxu0 0.0
  %699 = vmatpush.msra.mxu0 0.0
  %700 = vmatpush.msra.mxu0 0.0
  %701 = vmatpush.msra.mxu0 0.0
  %702 = vmatpush.msra.mxu0 0.0
  %703 = vmatpush.msra.mxu0 0.0
  %704 = vmatpush.msra.mxu0 0.0
  %705 = vmatpush.msra.mxu0 0.0
  %706 = vmatpush.msra.mxu0 0.0
  %707 = vmatpush.msra.mxu0 0.0
  %708 = vmatpush.msra.mxu0 0.0
  %709 = vmatpush.msra.mxu0 0.0
  %710 = vmatpush.msra.mxu0 %v689
  %711 = vmatpush.msra.mxu0 %v688
  %712 = vmatpush.msra.mxu0 %v687
  %713 = vmatpush.msra.mxu0 %v686
  %714 = vmatmul.f32.gmra.mxu0 %v696
  %v715 = vpop.f32.mrf.mxu0
  %v716 = vadd.f32 0.0, %v715
  %717 = vdwg.mxu0
  %v719 = vsel %vm218, %v587, 0
  %721 = vmatpush.msra.mxu0 0.0
  %722 = vmatpush.msra.mxu0 0.0
  %723 = vmatpush.msra.mxu0 0.0
  %724 = vmatpush.msra.mxu0 0.0
  %725 = vmatpush.msra.mxu0 0.0
  %726 = vmatpush.msra.mxu0 0.0
  %727 = vmatpush.msra.mxu0 0.0
  %728 = vmatpush.msra.mxu0 0.0
  %729 = vmatpush.msra.mxu0 0.0
  %730 = vmatpush.msra.mxu0 0.0
  %731 = vmatpush.msra.mxu0 0.0
  %732 = vmatpush.msra.mxu0 0.0
  %733 = vmatpush.msra.mxu0 %v685
  %734 = vmatpush.msra.mxu0 %v684
  %735 = vmatpush.msra.mxu0 %v683
  %736 = vmatpush.msra.mxu0 %v682
  %737 = vmatmul.f32.gmra.mxu0 %v719
  %v738 = vpop.f32.mrf.mxu0
  %v739 = vadd.f32 %v716, %v738
  %740 = vdwg.mxu0
  %v742 = vsel %vm131, %v646, 0
  %744 = vmatpush.msra.mxu0 0.0
  %745 = vmatpush.msra.mxu0 0.0
  %746 = vmatpush.msra.mxu0 0.0
  %747 = vmatpush.msra.mxu0 0.0
  %748 = vmatpush.msra.mxu0 0.0
  %749 = vmatpush.msra.mxu0 0.0
  %750 = vmatpush.msra.mxu0 0.0
  %751 = vmatpush.msra.mxu0 0.0
  %752 = vmatpush.msra.mxu0 0.0
  %753 = vmatpush.msra.mxu0 0.0
  %754 = vmatpush.msra.mxu0 0.0
  %755 = vmatpush.msra.mxu0 0.0
  %756 = vmatpush.msra.mxu0 0.0
  %757 = vmatpush.msra.mxu0 0.0
  %758 = vmatpush.msra.mxu0 %v691
  %759 = vmatpush.msra.mxu0 %v690
  %760 = vmatmul.f32.gmra.mxu0 %v742
  %v761 = vpop.f32.mrf.mxu0
  %v762 = vadd.f32 0.0, %v761
  %763 = vdwg.mxu0
  %v764 = vadd.f32 %v739, %v762
  %v766 = vsel %vm131, %v681, 0
  %768 = vmatpush.msra.mxu0 0.0
  %769 = vmatpush.msra.mxu0 0.0
  %770 = vmatpush.msra.mxu0 0.0
  %771 = vmatpush.msra.mxu0 0.0
  %772 = vmatpush.msra.mxu0 0.0
  %773 = vmatpush.msra.mxu0 0.0
  %774 = vmatpush.msra.mxu0 0.0
  %775 = vmatpush.msra.mxu0 0.0
  %776 = vmatpush.msra.mxu0 0.0
  %777 = vmatpush.msra.mxu0 0.0
  %778 = vmatpush.msra.mxu0 0.0
  %779 = vmatpush.msra.mxu0 0.0
  %780 = vmatpush.msra.mxu0 0.0
  %781 = vmatpush.msra.mxu0 0.0
  %782 = vmatpush.msra.mxu0 %v693
  %783 = vmatpush.msra.mxu0 %v692
  %784 = vmatmul.f32.gmra.mxu0 %v766
  %v785 = vpop.f32.mrf.mxu0
  %v786 = vadd.f32 0.0, %v785
  %787 = vdwg.mxu0
  %v788 = vadd.f32 %v764, %v786
  %v789 = vperm.slane %v694, 0
  %v790 = vadd.f32 %v788, %v789
  %vm791 = vcmp.gt.f32.partialorder %v790, 0.0
  %v792 = vperm.slane %v694, 1
  %v793 = vmul.f32 %v792, %v790
  %v794 = vsel %vm791, %v790, %v793
  %v795 = vld [vmem:[%s19] sm:$0xff]
  %v796 = vld [vmem:[%s19 + $0x8] sm:$0xff]
  %v797 = vld [vmem:[%s19 + $0x10] sm:$0xff]
  %v798 = vld [vmem:[%s19 + $0x18] sm:$0xff]
  %v799 = vld [vmem:[%s19 + $0x20] sm:$0xff]
  %v800 = vld [vmem:[%s19 + $0x28] sm:$0xff]
  %v801 = vld [vmem:[%s19 + $0x30] sm:$0xff]
  %v802 = vld [vmem:[%s19 + $0x38] sm:$0xff]
  %v803 = vld [vmem:[#allocation2] sm:$0x1]
  %v805 = vperm.slane %v803, 0
  %vm807 = vcmask 523264
  %v809 = vsel %vm807, %v794, 0
  %811 = vmatpush.msra.mxu0 0.0
  %812 = vmatpush.msra.mxu0 0.0
  %813 = vmatpush.msra.mxu0 0.0
  %814 = vmatpush.msra.mxu0 0.0
  %815 = vmatpush.msra.mxu0 0.0
  %816 = vmatpush.msra.mxu0 0.0
  %817 = vmatpush.msra.mxu0 0.0
  %818 = vmatpush.msra.mxu0 0.0
  %819 = vmatpush.msra.mxu0 %v802
  %820 = vmatpush.msra.mxu0 %v801
  %821 = vmatpush.msra.mxu0 %v800
  %822 = vmatpush.msra.mxu0 %v799
  %823 = vmatpush.msra.mxu0 %v798
  %824 = vmatpush.msra.mxu0 %v797
  %825 = vmatpush.msra.mxu0 %v796
  %826 = vmatpush.msra.mxu0 %v795
  %827 = vmatmul.f32.gmra.mxu0 %v809
  %v828 = vpop.f32.mrf.mxu0
  %v829 = vadd.f32 %v805, %v828
  %830 = vdwg.mxu0
  %vm831 = vcmask 1024
  %832 = vst.msk [vmem:[%s21] sm:$0x3] %vm831, %v829
  // Predicated region
  $region86: #{forward.1} parent=0 // pred_check
    _
  $region87: #{forward.1} parent=0 // pred_check_branch
    %834 = sbr.rel (0) target = $region89
  $region88: #{forward.1} parent=0 // pred_region
    _
  $region89: #{forward.1} parent=0 // pred_fallthru
    _
  // Predicated region
  $region90: #{forward.1} parent=0 // pred_check
    _
  $region91: #{forward.1} parent=0 // pred_check_branch
    %836 = sbr.rel (0) target = $region93
  $region92: #{forward.1} parent=0 // pred_region
    _
  $region93: #{forward.1} parent=0 // pred_fallthru
    _

</llo_original>
